<compile_context>
chip_gen: v5e
topology: v5e:2x2
jax: 0.10.0
libtpu: 0.0.40
codegen_flags: <defaults>
</compile_context>

<pallas_src>
import jax
import jax.numpy as jnp
from jax.experimental import pallas as pl
from jax.experimental.pallas import tpu as pltpu


def _make_merger_kernel(head: int, f_pad: int):
    """Kernel: per-head unrolled VPU FMA accumulation (no XLU reduce)."""

    def _kernel(sm_ref, x_ref, o_ref):
        # sm_ref: [1, H*Fp]  f32 softmaxed merge weights (constant, VMEM-resident)
        # x_ref:  [TB, H*Fp] input tile (heads flattened into the lane axis)
        # o_ref:  [TB, Fp]   merged output tile
        F = f_pad
        # Cast per-head slices individually: only one (TB, Fp) f32 slab live at
        # a time (matters on v5e, which has no bf16 VPU path).
        acc = x_ref[:, 0:F].astype(jnp.float32) * sm_ref[:, 0:F]
        for h in range(1, head):
            acc += (x_ref[:, h * F:(h + 1) * F].astype(jnp.float32)
                    * sm_ref[:, h * F:(h + 1) * F])
        o_ref[...] = acc.astype(o_ref.dtype)

    return _kernel


def _vmem_capacity_bytes() -> int:
    try:
        return int(pltpu.get_tpu_info().vmem_capacity_bytes)
    except Exception:  # pragma: no cover - query unavailable
        return 64 * 1024 * 1024  # conservative: v7x has 64 MiB per TC


def _per_row_bytes(head: int, f_pad: int, x_item: int, out_item: int) -> int:
    """Per-batch-row VMEM footprint: double-buffered blocks + f32 temporaries."""
    hf = head * f_pad
    return (2 * hf * x_item          # double-buffered input block
            + 2 * f_pad * out_item   # double-buffered output block
            + 4 * f_pad * 4)         # in-kernel f32 acc + per-head cast/product slabs


def _choose_batch_tile(bs: int, head: int, f_pad: int,
                       x_item: int, out_item: int) -> int:
    """Batch tile: fits the double-buffered pipeline in VMEM, keeps >=2 balanced
    grid steps (v7x megacore) and 8-row sublane alignment."""
    vmem_bytes = _vmem_capacity_bytes()
    budget = min(vmem_bytes // 4, 24 * 1024 * 1024)
    per_row = max(_per_row_bytes(head, f_pad, x_item, out_item), 1)
    tb_max = budget // per_row
    tb_max = max(8, tb_max - (tb_max % 8))
    tb_max = min(tb_max, 4096)
    # TODO(synk): for pathological head*fea_dim where even an 8-row tile exceeds
    # VMEM, a secondary fea_dim-tiling grid axis would be needed; not required
    # for realistic RNN-agent sizes (vmem_limit below covers the 8-row case).

    if bs <= 8:
        return bs  # full-extent block is always legal
    steps = -(-bs // tb_max)            # min steps that fit the budget
    if bs >= 16:
        steps = max(steps, 2)           # keep both v7x TensorCores busy
    steps = min(steps, -(-bs // 8))     # no step smaller than 8 rows
    tb = -(-bs // steps)                # balance tiles across steps
    tb = ((tb + 7) // 8) * 8            # sublane (8) alignment
    if tb >= bs:
        return bs
    return tb


class Merger:
    """JAX/Pallas port of the PyTorch Merger module."""

    def __init__(self, head: int, fea_dim: int):
        self.head = head
        self.fea_dim = fea_dim
        if head > 1:
            # Deterministic init, identical to th.Tensor(...).fill_(1.0)
            self.weight = jnp.ones((1, head, fea_dim), dtype=jnp.float32)
        else:
            self.weight = None

    def __call__(self, x: jax.Array) -> jax.Array:
        bs, head, fea_dim = x.shape
        assert head == self.head and fea_dim == self.fea_dim

        if self.head == 1:
            # Metadata-only squeeze; a kernel here would be pure HBM read+write
            # for zero compute.
            return jnp.squeeze(x, axis=1)

        # Hoist the tiny softmax out of the kernel (it would otherwise be
        # recomputed every grid step on the EUP).
        sm = jax.nn.softmax(self.weight.astype(jnp.float32), axis=1)

        # Lane alignment: pad fea_dim to a multiple of 128 so every per-head
        # slice sits on a 128-lane boundary and the output store is unmasked.
        f_pad = ((fea_dim + 127) // 128) * 128
        if f_pad != fea_dim:
            pad = f_pad - fea_dim
            x = jnp.pad(x, ((0, 0), (0, 0), (0, pad)))
            sm = jnp.pad(sm, ((0, 0), (0, 0), (0, pad)))

        sm_flat = sm.reshape(1, head * f_pad)
        x_flat = x.reshape(bs, head * f_pad)   # metadata-only when no padding

        # PyTorch promotion: f32 weight * x -> f32 output.
        out_dtype = jnp.promote_types(x.dtype, jnp.float32)
        x_item = jnp.dtype(x.dtype).itemsize
        out_item = jnp.dtype(out_dtype).itemsize

        tb = _choose_batch_tile(bs, head, f_pad, x_item, out_item)
        grid = (pl.cdiv(bs, tb),)

        # Explicit VMEM limit from the actual per-step footprint (+ headroom),
        # clamped to physical VMEM. Covers v5e's 16 MiB scoped default and
        # large-tile configs on v6e; safe on v7x's 64 MiB physical.
        footprint = (_per_row_bytes(head, f_pad, x_item, out_item) * tb
                     + 2 * head * f_pad * 4)                 # sm block (2 bufs)
        vmem_limit = int(min(_vmem_capacity_bytes(),
                             footprint + 8 * 1024 * 1024))

        cost = pl.CostEstimate(
            flops=2 * bs * head * f_pad,
            transcendentals=0,
            bytes_accessed=(bs * head * f_pad * x_item
                            + head * f_pad * 4
                            + bs * f_pad * out_item),
        )

        out = pl.pallas_call(
            _make_merger_kernel(head, f_pad),
            out_shape=jax.ShapeDtypeStruct((bs, f_pad), out_dtype),
            grid=grid,
            in_specs=[
                # Constant weight tile: same block every step -> VMEM-resident.
                pl.BlockSpec((1, head * f_pad), lambda i: (0, 0)),
                # Batch-tiled input: double-buffered DMA overlaps compute.
                pl.BlockSpec((tb, head * f_pad), lambda i: (i, 0)),
            ],
            out_specs=pl.BlockSpec((tb, f_pad), lambda i: (i, 0)),
            compiler_params=pltpu.CompilerParams(
                dimension_semantics=("parallel",),
                vmem_limit_bytes=vmem_limit),
            cost_estimate=cost,
        )(sm_flat, x_flat)

        if f_pad != fea_dim:
            out = out[:, :fea_dim]
        return out


def _reference(weight, x, head):
    if head > 1:
        sm = jax.nn.softmax(weight.astype(jnp.float32), axis=1)
        return jnp.sum(sm * x.astype(jnp.float32), axis=1)
    return jnp.squeeze(x, axis=1)


if __name__ == "__main__":
    key = jax.random.PRNGKey(0)
    k_x, k_w, k_x1, k_x2, k_w2 = jax.random.split(key, 5)

    # --- main case: [bs, n_head, fea_dim] with fea_dim % 128 == 0 ------------
    bs, head, fea_dim = 16, 4, 128
    x = jax.random.normal(k_x, (bs, head, fea_dim), dtype=jnp.float32)
    merger = Merger(head, fea_dim)
    # RANDOM weight for the check (all-ones softmax is uniform and would hide
    # a wrong softmax axis).
    merger.weight = jax.random.normal(k_w, (1, head, fea_dim), dtype=jnp.float32)
    out = jax.block_until_ready(merger(x))
    ref = _reference(merger.weight, x, head)
    assert out.shape == (bs, fea_dim)
    assert jnp.allclose(out, ref, atol=1e-5, rtol=1e-5), "mismatch vs reference"

    # --- misaligned fea_dim (exercises lane-padding path) --------------------
    bs2, head2, fea_dim2 = 10, 3, 96
    x2 = jax.random.normal(k_x2, (bs2, head2, fea_dim2), dtype=jnp.float32)
    merger2 = Merger(head2, fea_dim2)
    merger2.weight = jax.random.normal(k_w2, (1, head2, fea_dim2), dtype=jnp.float32)
    out2 = jax.block_until_ready(merger2(x2))
    ref2 = _reference(merger2.weight, x2, head2)
    assert out2.shape == (bs2, fea_dim2)
    assert jnp.allclose(out2, ref2, atol=1e-5, rtol=1e-5), "mismatch (padded path)"

    # --- head == 1 path: pure squeeze, no kernel ------------------------------
    x1 = jax.random.normal(k_x1, (bs, 1, fea_dim), dtype=jnp.float32)
    merger1 = Merger(1, fea_dim)
    out1 = jax.block_until_ready(merger1(x1))
    assert jnp.allclose(out1, jnp.squeeze(x1, axis=1))

    print("KERNEL_OK")
</pallas_src>

<mosaic_0001>
module attributes {stable_mosaic.version = 11 : i64} {
  func.func @_kernel(%arg0: i32, %arg1: memref<1x512xf32, #tpu.memory_space<vmem>>, %arg2: memref<8x512xf32, #tpu.memory_space<vmem>>, %arg3: memref<8x128xf32, #tpu.memory_space<vmem>>) attributes {dimension_semantics = [#tpu.dimension_semantics<parallel>], iteration_bounds = array<i64: 2>, scalar_prefetch = 0 : i64, scratch_operands = 0 : i64, tpu.core_type = #tpu.core_type<tc>, window_params = [{pipeline_mode = #tpu.pipeline_mode<synchronous>, transform_indices = @transform_0, window_bounds = array<i64: 1, 512>}, {transform_indices = @transform_1, window_bounds = array<i64: 8, 512>}, {transform_indices = @transform_2, window_bounds = array<i64: 8, 128>}]} {
    %c0 = arith.constant 0 : index
    %c0_0 = arith.constant 0 : index
    %0 = vector.load %arg2[%c0, %c0_0] : memref<8x512xf32, #tpu.memory_space<vmem>>, vector<8x128xf32>
    %c0_1 = arith.constant 0 : index
    %c0_2 = arith.constant 0 : index
    %1 = vector.load %arg1[%c0_1, %c0_2] : memref<1x512xf32, #tpu.memory_space<vmem>>, vector<1x128xf32>
    %2 = vector.broadcast %1 : vector<1x128xf32> to vector<8x128xf32>
    %3 = arith.mulf %0, %2 : vector<8x128xf32>
    %c0_3 = arith.constant 0 : index
    %c128 = arith.constant 128 : index
    %4 = vector.load %arg2[%c0_3, %c128] : memref<8x512xf32, #tpu.memory_space<vmem>>, vector<8x128xf32>
    %c0_4 = arith.constant 0 : index
    %c128_5 = arith.constant 128 : index
    %5 = vector.load %arg1[%c0_4, %c128_5] : memref<1x512xf32, #tpu.memory_space<vmem>>, vector<1x128xf32>
    %6 = vector.broadcast %5 : vector<1x128xf32> to vector<8x128xf32>
    %7 = arith.mulf %4, %6 : vector<8x128xf32>
    %8 = arith.addf %3, %7 : vector<8x128xf32>
    %c0_6 = arith.constant 0 : index
    %c256 = arith.constant 256 : index
    %9 = vector.load %arg2[%c0_6, %c256] : memref<8x512xf32, #tpu.memory_space<vmem>>, vector<8x128xf32>
    %c0_7 = arith.constant 0 : index
    %c256_8 = arith.constant 256 : index
    %10 = vector.load %arg1[%c0_7, %c256_8] : memref<1x512xf32, #tpu.memory_space<vmem>>, vector<1x128xf32>
    %11 = vector.broadcast %10 : vector<1x128xf32> to vector<8x128xf32>
    %12 = arith.mulf %9, %11 : vector<8x128xf32>
    %13 = arith.addf %8, %12 : vector<8x128xf32>
    %c0_9 = arith.constant 0 : index
    %c384 = arith.constant 384 : index
    %14 = vector.load %arg2[%c0_9, %c384] : memref<8x512xf32, #tpu.memory_space<vmem>>, vector<8x128xf32>
    %c0_10 = arith.constant 0 : index
    %c384_11 = arith.constant 384 : index
    %15 = vector.load %arg1[%c0_10, %c384_11] : memref<1x512xf32, #tpu.memory_space<vmem>>, vector<1x128xf32>
    %16 = vector.broadcast %15 : vector<1x128xf32> to vector<8x128xf32>
    %17 = arith.mulf %14, %16 : vector<8x128xf32>
    %18 = arith.addf %13, %17 : vector<8x128xf32>
    %c0_12 = arith.constant 0 : index
    %c0_13 = arith.constant 0 : index
    %19 = vector.load %arg3[%c0_12, %c0_13] : memref<8x128xf32, #tpu.memory_space<vmem>>, vector<8x128xf32>
    tpu.vector_store %arg3[%c0_12, %c0_13], %18 {strides = array<i32>} : memref<8x128xf32, #tpu.memory_space<vmem>>, vector<8x128xf32>,
    return
  }
  func.func @transform_0(%arg0: i32) -> (i32, i32) {
    %c0_i32 = arith.constant 0 : i32
    %c0_i32_0 = arith.constant 0 : i32
    %c0_i32_1 = arith.constant 0 : i32
    return %c0_i32, %c0_i32_0 : i32, i32
  }
  func.func @transform_1(%arg0: i32) -> (i32, i32) {
    %c0_i32 = arith.constant 0 : i32
    %c0_i32_0 = arith.constant 0 : i32
    return %arg0, %c0_i32 : i32, i32
  }
  func.func @transform_2(%arg0: i32) -> (i32, i32) {
    %c0_i32 = arith.constant 0 : i32
    %c0_i32_0 = arith.constant 0 : i32
    return %arg0, %c0_i32 : i32, i32
  }
}

</mosaic_0001>

<llo_original>
// kernel: tpu_custom_call.1
$region0: #{tpu_custom_call.1}
  #allocation0 [shape = 'u32[]', space=smem, size = 0x4, offset = 0x4, fixed_abs, tag = 'smem constant byte address 0x4 - core index']
  #allocation1 [shape = 'u32[72,128]{1,0:T(1,128)}', space=vmem, size = 0x9000, scoped, tag = 'internal scratch']
  %s0 = inlined_call_operand.hbm [shape: f32[1,512], index: 0, kind: input, shape index: {}]
  %s1 = inlined_call_operand.hbm [shape: f32[16,512], index: 1, kind: input, shape index: {}]
  %s2 = inlined_call_operand.hbm [shape: f32[16,128], index: 2, kind: output, shape index: {}]
  %s3 = sld [smem:[#allocation0]]
  $region49: #{tpu_custom_call.1} parent=0
    _
  %s5 = ssub.s32 1, %s3
  %s6 = scalar_select 0, %s5, %s3
  $region1: #{tpu_custom_call.1} parent=0
    #allocation2 [shape = 'u8[2048]{0}', space=vmem, size = 0x800, scoped, tag = 'input window, operand 0, single buffered']
    #allocation3 [shape = 's32[2]{0}', space=sflag, size = 0x8, scoped, tag = 'scoped memory for tpu_custom_call.1']
    #allocation4 [shape = 's32[2]{0}', space=sflag, size = 0x8, scoped, tag = 'scoped memory for tpu_custom_call.1']
    #allocation5 [shape = 'u8[32768]{0}', space=vmem, size = 0x8000, scoped, tag = 'input window, operand 1']
    #allocation6 [shape = 's32[2]{0}', space=sflag, size = 0x8, scoped, tag = 'scoped memory for tpu_custom_call.1']
    #allocation7 [shape = 'u8[8192]{0}', space=vmem, size = 0x2000, scoped, tag = 'output window, operand 0']
    %7 = vsyncpa [#allocation3], 0
    %8 = vsyncpa [#allocation6], 0
    %s9 = scalar_lea.sflag [#allocation6], 1
    %10 = vsyncpa %s9, 0
    %11 = vsyncpa [#allocation4], 0
    %s12 = scalar_lea.sflag [#allocation4], 1
    %13 = vsyncpa %s12, 0
    loop: start=0, step=1, limit=4
    $region2: #{tpu_custom_call.1} parent=1 // loop_pre_header
      _
    $region3: #{tpu_custom_call.1} parent=1 // loop_header
      %s15 = sphi 0, %s19
      %p16 = scmp.ge.s32.totalorder %s15, 4
      %s23 = sphi 0, %s23
      %s25 = sphi 0, %s23
      %s26 = sphi 0, %s25
      %s40 = sphi 0, %s26
      %s46 = sphi 0, %s48
      %s49 = sphi 0, %s46
      %s50 = sphi 0, %s49
      %s66 = sphi 0, %s50
      %s72 = sphi 0, %s74
      %s75 = sphi 0, %s72
      %s76 = sphi 0, %s75
      %s92 = sphi 0, %s76
    $region4: #{tpu_custom_call.1} parent=1 // loop_header_branch
      %18 = sbr.rel (%p16) target = $region8
    $region5: #{tpu_custom_call.1} parent=1 // loop_body
      %s20 = ssub.s32 %s15, 1
      %s21 = ssub.s32 %s15, 2
      %s22 = sadd.s32 %s15, 1
      %s24 = sadd.s32 %s23, 1
      %p27 = scmp.eq.s32.totalorder %s15, 1
      %p28 = scmp.ne.s32.totalorder %s23, %s25
      %p29 = scmp.eq.s32.totalorder %s15, 0
      %p30 = por %p28, %p29
      %p31 = scmp.ne.s32.totalorder %s23, %s25
      %p32 = scmp.eq.s32.totalorder %s20, 1
      %p33 = por %p31, %p32
      %p34 = scmp.ne.s32.totalorder %s25, %s26
      %p35 = scmp.eq.s32.totalorder %s20, 0
      %p36 = por %p34, %p35
      %p37 = scmp.ne.s32.totalorder %s25, %s26
      %p38 = scmp.eq.s32.totalorder %s21, 1
      %p39 = por %p37, %p38
      %p41 = scmp.ne.s32.totalorder %s26, %s40
      %p42 = scmp.eq.s32.totalorder %s21, 0
      %p43 = por %p41, %p42
      %s44 = ssub.s32 %s15, %s22
      %p45 = scmp.eq.s32.totalorder %s44, 0
      %s47 = sadd.s32 %s46, 1
      %s48 = scalar_select %p45, %s46, %s47
      %p51 = pneg %p45
      %p52 = scmp.eq.s32.totalorder %s15, 1
      %p53 = por %p51, %p52
      %p54 = scmp.ne.s32.totalorder %s46, %s49
      %p55 = scmp.eq.s32.totalorder %s15, 0
      %p56 = por %p54, %p55
      %p57 = scmp.ne.s32.totalorder %s46, %s49
      %p58 = scmp.eq.s32.totalorder %s20, 1
      %p59 = por %p57, %p58
      %p60 = scmp.ne.s32.totalorder %s49, %s50
      %p61 = scmp.eq.s32.totalorder %s20, 0
      %p62 = por %p60, %p61
      %p63 = scmp.ne.s32.totalorder %s49, %s50
      %p64 = scmp.eq.s32.totalorder %s21, 1
      %p65 = por %p63, %p64
      %p67 = scmp.ne.s32.totalorder %s50, %s66
      %p68 = scmp.eq.s32.totalorder %s21, 0
      %p69 = por %p67, %p68
      %s70 = ssub.s32 %s15, %s22
      %p71 = scmp.eq.s32.totalorder %s70, 0
      %s73 = sadd.s32 %s72, 1
      %s74 = scalar_select %p71, %s72, %s73
      %p77 = pneg %p71
      %p78 = scmp.eq.s32.totalorder %s15, 1
      %p79 = por %p77, %p78
      %p80 = scmp.ne.s32.totalorder %s72, %s75
      %p81 = scmp.eq.s32.totalorder %s15, 0
      %p82 = por %p80, %p81
      %p83 = scmp.ne.s32.totalorder %s72, %s75
      %p84 = scmp.eq.s32.totalorder %s20, 1
      %p85 = por %p83, %p84
      %p86 = scmp.ne.s32.totalorder %s75, %s76
      %p87 = scmp.eq.s32.totalorder %s20, 0
      %p88 = por %p86, %p87
      %p89 = scmp.ne.s32.totalorder %s75, %s76
      %p90 = scmp.eq.s32.totalorder %s21, 1
      %p91 = por %p89, %p90
      %p93 = scmp.ne.s32.totalorder %s76, %s92
      %p94 = scmp.eq.s32.totalorder %s21, 0
      %p95 = por %p93, %p94
      %p96 = scmp.le.s32.totalorder 1, %s15
      %p97 = scmp.lt.s32.totalorder %s15, 3
      %p98 = pnand %p96, %p97
      %p99 = pneg %p98
      // Predicated region
      $region9: #{tpu_custom_call.1} parent=5 // pred_check
        _
      $region10: #{tpu_custom_call.1} parent=5 // pred_check_branch
        %101 = sbr.rel (%p98) target = $region12
      $region11: #{tpu_custom_call.1} parent=5 // pred_region
        %s102 = ssub.s32 %s15, 1
        // Predicated region
        $region13: #{tpu_custom_call.1} parent=11 // pred_check
          %p103 = pneg %p36
        $region14: #{tpu_custom_call.1} parent=11 // pred_check_branch
          %105 = sbr.rel (%p103) target = $region16
        $region15: #{tpu_custom_call.1} parent=11 // pred_region
          %107 = vsyncadd [#allocation3], 0
          %s109 = sshll.u32 %s0, 4
          %s110 = int_to_ptr.hbm [resolvable:$true] %s109
          %s111 = sshll.u32 [#allocation2], 4
          %s112 = int_to_ptr.vmem [resolvable:$true] %s111
          %114 = dma.hbm_to_vmem [thread:$0]  %s110, 64, %s112, [#allocation3]
        $region16: #{tpu_custom_call.1} parent=11 // pred_fallthru
          _
      $region12: #{tpu_custom_call.1} parent=5 // pred_fallthru
        _
      %p115 = scmp.lt.s32.totalorder %s15, 2
      // Predicated region
      $region17: #{tpu_custom_call.1} parent=5 // pred_check
        %p116 = pneg %p115
      $region18: #{tpu_custom_call.1} parent=5 // pred_check_branch
        %118 = sbr.rel (%p116) target = $region20
      $region19: #{tpu_custom_call.1} parent=5 // pred_region
        // Predicated region
        $region21: #{tpu_custom_call.1} parent=19 // pred_check
          %p119 = pneg %p56
        $region22: #{tpu_custom_call.1} parent=19 // pred_check_branch
          %121 = sbr.rel (%p119) target = $region24
        $region23: #{tpu_custom_call.1} parent=19 // pred_region
          %s122 = sand.u32 %s46, 1
          %s123 = scalar_lea.sflag [#allocation6], %s122
          %s124 = sand.u32 %s46, 1
          %s125 = smul.addr %s124, 32
          %s126 = scalar_lea.vmem [#allocation5], %s125
          %128 = vsyncadd %s123, 0
          %s129 = smul.addr %s15, 4
          %s130 = smul.addr %s129, 8
          %s131 = scalar_lea.hbm %s1, %s130
          %s133 = sshll.u32 %s131, 4
          %s134 = int_to_ptr.hbm [resolvable:$true] %s133
          %s135 = sshll.u32 %s126, 4
          %s136 = int_to_ptr.vmem [resolvable:$true] %s135
          %138 = dma.hbm_to_vmem [thread:$0]  %s134, 512, %s136, %s123
        $region24: #{tpu_custom_call.1} parent=19 // pred_fallthru
          _
      $region20: #{tpu_custom_call.1} parent=5 // pred_fallthru
        _
      %p139 = scmp.le.s32.totalorder 1, %s15
      %p140 = scmp.lt.s32.totalorder %s15, 3
      %p141 = pnand %p139, %p140
      %p142 = pneg %p141
      // Predicated region
      $region25: #{tpu_custom_call.1} parent=5 // pred_check
        _
      $region26: #{tpu_custom_call.1} parent=5 // pred_check_branch
        %144 = sbr.rel (%p141) target = $region28
      $region27: #{tpu_custom_call.1} parent=5 // pred_region
        %s145 = ssub.s32 %s15, 1
        // Predicated region
        $region29: #{tpu_custom_call.1} parent=27 // pred_check
          %p146 = pneg %p36
        $region30: #{tpu_custom_call.1} parent=27 // pred_check_branch
          %148 = sbr.rel (%p146) target = $region32
        $region31: #{tpu_custom_call.1} parent=27 // pred_region
          %150 = dma.done [#allocation3], 64
        $region32: #{tpu_custom_call.1} parent=27 // pred_fallthru
          _
        %s151 = sand.u32 %s49, 1
        %s152 = scalar_lea.sflag [#allocation6], %s151
        %s153 = sand.u32 %s49, 1
        %s154 = smul.addr %s153, 32
        %s155 = scalar_lea.vmem [#allocation5], %s154
        // Predicated region
        $region33: #{tpu_custom_call.1} parent=27 // pred_check
          %p156 = pneg %p62
        $region34: #{tpu_custom_call.1} parent=27 // pred_check_branch
          %158 = sbr.rel (%p156) target = $region36
        $region35: #{tpu_custom_call.1} parent=27 // pred_region
          %160 = dma.done %s152, 512
        $region36: #{tpu_custom_call.1} parent=27 // pred_fallthru
          _
        %p161 = pneg %p36
        %p162 = pneg %p33
        %s163 = sand.u32 %s49, 1
        %s164 = scalar_lea.sflag [#allocation6], %s163
        %s165 = sand.u32 %s49, 1
        %s166 = smul.addr %s165, 32
        %s167 = scalar_lea.vmem [#allocation5], %s166
        %p168 = pneg %p62
        %p169 = pneg %p59
        %p170 = pneg %p88
        %p171 = pneg %p85
        %s172 = sand.u32 %s75, 1
        %s173 = scalar_lea.sflag [#allocation4], %s172
        %s174 = sand.u32 %s75, 1
        %s175 = smul.addr %s174, 8
        %s176 = scalar_lea.vmem [#allocation7], %s175
        %v177 = vld [vmem:[%s155] sm:$0xff]
        %v178 = vld [vmem:[#allocation2] sm:$0x1]
        %v180 = vperm.slane %v178, 0
        %v182 = vmul.f32 %v177, %v180
        %v183 = vld [vmem:[%s155 + $0x8] sm:$0xff]
        %v184 = vld [vmem:[#allocation2 + $0x1] sm:$0x1]
        %v186 = vperm.slane %v184, 0
        %v188 = vmul.f32 %v183, %v186
        %v189 = vadd.f32 %v182, %v188
        %v190 = vld [vmem:[%s155 + $0x10] sm:$0xff]
        %v191 = vld [vmem:[#allocation2 + $0x2] sm:$0x1]
        %v193 = vperm.slane %v191, 0
        %v195 = vmul.f32 %v190, %v193
        %v196 = vadd.f32 %v189, %v195
        %v197 = vld [vmem:[%s155 + $0x18] sm:$0xff]
        %v198 = vld [vmem:[#allocation2 + $0x3] sm:$0x1]
        %v200 = vperm.slane %v198, 0
        %v202 = vmul.f32 %v197, %v200
        %v203 = vadd.f32 %v196, %v202
        %204 = vst [vmem:[%s176] sm:$0xff] %v203
        %s205 = sand.u32 %s75, 1
        %s206 = scalar_lea.sflag [#allocation4], %s205
        %s207 = sand.u32 %s75, 1
        %s208 = smul.addr %s207, 8
        %s209 = scalar_lea.vmem [#allocation7], %s208
        // Predicated region
        $region37: #{tpu_custom_call.1} parent=27 // pred_check
          %p210 = pneg %p85
        $region38: #{tpu_custom_call.1} parent=27 // pred_check_branch
          %212 = sbr.rel (%p210) target = $region40
        $region39: #{tpu_custom_call.1} parent=27 // pred_region
          %214 = vsyncadd %s206, 0
          %s215 = smul.addr %s20, 8
          %s216 = scalar_lea.hbm %s2, %s215
          %s218 = sshll.u32 %s209, 4
          %s219 = int_to_ptr.vmem [resolvable:$true] %s218
          %s220 = sshll.u32 %s216, 4
          %s221 = int_to_ptr.hbm [resolvable:$true] %s220
          %223 = dma.vmem_to_hbm [thread:$0]  %s219, 128, %s221, %s206
        $region40: #{tpu_custom_call.1} parent=27 // pred_fallthru
          _
      $region28: #{tpu_custom_call.1} parent=5 // pred_fallthru
        _
      %p224 = scmp.le.s32.totalorder 2, %s15
      // Predicated region
      $region41: #{tpu_custom_call.1} parent=5 // pred_check
        %p225 = pneg %p224
      $region42: #{tpu_custom_call.1} parent=5 // pred_check_branch
        %227 = sbr.rel (%p225) target = $region44
      $region43: #{tpu_custom_call.1} parent=5 // pred_region
        %s228 = ssub.s32 %s15, 2
        // Predicated region
        $region45: #{tpu_custom_call.1} parent=43 // pred_check
          %p229 = pneg %p91
        $region46: #{tpu_custom_call.1} parent=43 // pred_check_branch
          %231 = sbr.rel (%p229) target = $region48
        $region47: #{tpu_custom_call.1} parent=43 // pred_region
          %s232 = sand.u32 %s76, 1
          %s233 = scalar_lea.sflag [#allocation4], %s232
          %s234 = sand.u32 %s76, 1
          %s235 = smul.addr %s234, 8
          %s236 = scalar_lea.vmem [#allocation7], %s235
          %238 = dma.done %s233, 128
        $region48: #{tpu_custom_call.1} parent=43 // pred_fallthru
          _
      $region44: #{tpu_custom_call.1} parent=5 // pred_fallthru
        _
    $region6: #{tpu_custom_call.1} parent=1 // loop_footer
      %s19 = sadd.s32 1, %s15
    $region7: #{tpu_custom_call.1} parent=1 // loop_footer_branch
      %14 = sbr.rel target = $region3
    $region8: #{tpu_custom_call.1} parent=1 // loop_exit
      _
    %239 = vsyncpa [#allocation3], 1
    %s240 = scalar_lea.sflag [#allocation3], 1
    %241 = vsyncpa %s240, 1
    %242 = vsyncpa [#allocation6], 1
    %s243 = scalar_lea.sflag [#allocation6], 1
    %244 = vsyncpa %s243, 1
    %245 = vsyncpa [#allocation4], 1
    %s246 = scalar_lea.sflag [#allocation4], 1
    %247 = vsyncpa %s246, 1

</llo_original>
